<compile_context>
chip_gen: v6e
topology: v6e:2x2x1
jax: 0.10.0
libtpu: 0.0.40
codegen_flags: <defaults>
</compile_context>

<pallas_src>
import numpy as np
import jax
import jax.numpy as jnp
from jax.experimental import pallas as pl
from jax.experimental.pallas import tpu as pltpu


# ----------------------------- Pallas kernel ------------------------------- #
def _pinvnet_kernel(x_ref, w_ref, b_ref, o_ref):
    # x_ref : (tb, tk)  bf16   batch tile of flattened ground-truth images
    # w_ref : (tk, tn)  bf16   tile of the fused operator W
    # b_ref : (1,  tn)  f32    tile of the fused bias b
    # o_ref : (tb, tn)  f32    output tile; its block index (i, j) is constant
    #                          across the k (reduction) axis, so it stays
    #                          VMEM-resident and doubles as the f32 accumulator.
    k = pl.program_id(2)

    @pl.when(k == 0)
    def _():
        o_ref[...] = jnp.zeros_like(o_ref)

    o_ref[...] += jnp.dot(x_ref[...], w_ref[...],
                          preferred_element_type=jnp.float32)

    @pl.when(k == pl.num_programs(2) - 1)
    def _():
        o_ref[...] += b_ref[...]


# ------------------------------ host helpers ------------------------------- #
def _round_up(v, m):
    return ((v + m - 1) // m) * m


def _vmem_budget_bytes():
    """Generation-aware VMEM budget (v7x: 64 MiB physical, v5e/v6e: 128 MiB)."""
    cap = None
    try:
        cap = getattr(pltpu.get_tpu_info(), "vmem_capacity_bytes", None)
    except Exception:
        cap = None
    if not cap:
        cap = 64 << 20                          # conservative (v7x-sized) default
    # Leave headroom for compiler-internal scratch; never exceed ~110 MiB
    # even on 128 MiB parts.
    return int(min(cap * 3 // 4, 110 << 20))


def _batch_tiles(bc, cap):
    """Balanced batch tiling; tb is a multiple of 16 (bf16 sublane packing)."""
    cap = max(16, (cap // 16) * 16)
    nb = -(-bc // cap)
    tb = _round_up(-(-bc // nb), 16)
    return tb, nb * tb


def _plan_tiles(BC, N, budget):
    """Return (tb, tn, tk, BCp, Kp, Np): tile sizes + padded problem dims.

    All double-buffered tiles (x bf16, W bf16, bias f32, out f32) must fit
    within `budget` bytes of VMEM.
    """
    Np = _round_up(N, 128)
    BC16 = _round_up(BC, 16)

    # --- preferred plan: W fully VMEM-resident (single j/k block) ----------- #
    w_bytes = 2 * Np * Np * 2 + 2 * Np * 4      # bf16 W (2 bufs) + f32 bias (2 bufs)
    per_row = Np * (2 * 2 + 2 * 4)              # x (bf16, 2 bufs) + out (f32, 2 bufs)
    if w_bytes + 16 * per_row <= budget:
        tb_cap = min(512, ((budget - w_bytes) // per_row // 16) * 16)
        tb, BCp = _batch_tiles(BC16, tb_cap)
        # Give the (parallel) batch axis >= 2 steps when cheap so v7x's two
        # TensorCores both get work; harmless on single-TC chips (W's block
        # index never changes, so it is still DMA'd only once).
        if BCp // tb < 2 and tb >= 32 and tb % 32 == 0:
            tb //= 2
        return tb, Np, Np, BCp, Np, Np

    # --- fallback: stream W in large MXU-aligned tiles ---------------------- #
    tb, BCp = _batch_tiles(BC16, 256)
    for tn in (2048, 1024, 512, 256, 128):      # prefer wide output tiles:
        if tn > Np:                             # x is re-streamed Np/tn times
            continue
        for tk in (2048, 1024, 512, 256, 128):
            if tk > Np:
                continue
            use = (2 * tb * tk * 2          # x tiles (bf16, double-buffered)
                   + 2 * tk * tn * 2        # W tiles (bf16, double-buffered)
                   + 2 * tn * 4             # bias tiles
                   + 2 * tb * tn * 4)       # out tiles (f32, double-buffered)
            if use <= budget:
                return tb, tn, tk, BCp, _round_up(Np, tk), _round_up(Np, tn)
    return tb, 128, 128, BCp, Np, Np


# --------------------- fused operator (memoized, host f64) ------------------ #
_OP_CACHE = {}


def _fused_operator(H, H_pinv, alpha):
    """Fold acquisition + prep + pinv into z = x @ W + b (computed once)."""
    key = (id(H), id(H_pinv), float(alpha), tuple(H.shape), tuple(H_pinv.shape))
    hit = _OP_CACHE.get(key)
    if hit is not None:
        return hit
    H64 = np.asarray(H, dtype=np.float64)
    Hp64 = np.asarray(H_pinv, dtype=np.float64)
    N = H64.shape[1]
    W64 = (H64.T @ Hp64.T) / float(alpha)                                 # (N, N)
    b64 = W64.sum(axis=0, keepdims=True) \
        - (H64 @ np.ones(N)).reshape(1, -1) @ Hp64.T                      # (1, N)
    out = (jnp.asarray(W64, dtype=jnp.bfloat16),      # bf16 MXU operand
           jnp.asarray(b64, dtype=jnp.float32))       # f32 bias
    _OP_CACHE[key] = out
    return out


# ---------------------------------- wrapper --------------------------------- #
def pinvnet_forward(x, H, H_pinv, alpha=1.0):
    """Full PinvNet forward: (B, C, h, w) -> (B, C, h, w)."""
    B, C, h, w = x.shape
    N = h * w
    M = H.shape[0]
    assert H.shape == (M, N) and H_pinv.shape == (N, M)
    BC = B * C

    Wb, b32 = _fused_operator(H, H_pinv, alpha)

    budget = _vmem_budget_bytes()
    tb, tn, tk, BCp, Kp, Np = _plan_tiles(BC, N, budget)
    nb, nj, nk = BCp // tb, Np // tn, Kp // tk

    xf = x.reshape(BC, N).astype(jnp.bfloat16)
    if (BCp, Kp) != (BC, N):
        xf = jnp.pad(xf, ((0, BCp - BC), (0, Kp - N)))
    if (Kp, Np) != (N, N):
        Wb = jnp.pad(Wb, ((0, Kp - N), (0, Np - N)))
        b32 = jnp.pad(b32, ((0, 0), (0, Np - N)))

    out = pl.pallas_call(
        _pinvnet_kernel,
        out_shape=jax.ShapeDtypeStruct((BCp, Np), jnp.float32),
        grid_spec=pltpu.PrefetchScalarGridSpec(
            num_scalar_prefetch=0,
            grid=(nb, nj, nk),
            in_specs=[
                pl.BlockSpec((tb, tk), lambda i, j, k: (i, k)),   # x tile
                pl.BlockSpec((tk, tn), lambda i, j, k: (k, j)),   # W tile
                pl.BlockSpec((1, tn), lambda i, j, k: (0, j)),    # bias tile
            ],
            out_specs=pl.BlockSpec((tb, tn), lambda i, j, k: (i, j)),
        ),
        compiler_params=pltpu.CompilerParams(
            dimension_semantics=("parallel", "parallel", "arbitrary"),
            vmem_limit_bytes=budget,
        ),
    )(xf, Wb, b32)

    return out[:BC, :N].reshape(B, C, h, w)


# --------------------------- deterministic params --------------------------- #
def sylvester_hadamard(n):
    H = np.array([[1.0]], dtype=np.float64)
    while H.shape[0] < n:
        H = np.block([[H, H], [H, -H]])
    assert H.shape[0] == n, "n must be a power of 2"
    return H


if __name__ == "__main__":
    B, C, h, w = 2, 4, 16, 16
    N = h * w          # 256
    M = N              # full Hadamard sampling (as in the module's example)
    alpha = 1.0

    # Measurement matrix and its Moore-Penrose pseudoinverse.
    H_np = sylvester_hadamard(N)[:M, :]            # (M, N), entries +/-1
    H_pinv_np = np.linalg.pinv(H_np)               # (N, M) == H^T / N here
    H = jnp.asarray(H_np, dtype=jnp.float32)
    H_pinv = jnp.asarray(H_pinv_np, dtype=jnp.float32)

    # Ground-truth images in [-1, 1].
    key = jax.random.PRNGKey(0)
    x = jax.random.uniform(key, (B, C, h, w), jnp.float32, minval=-1.0, maxval=1.0)

    z = pinvnet_forward(x, H, H_pinv, alpha=alpha)
    z = jax.block_until_ready(z)

    # Second call exercises the memoized host precompute path.
    z2 = jax.block_until_ready(pinvnet_forward(x, H, H_pinv, alpha=alpha))

    # Reference (float64, numpy) of the exact original (unfolded) pipeline.
    x64 = np.asarray(x, dtype=np.float64).reshape(B * C, N)
    g64 = (x64 + 1.0) / 2.0
    yp = g64 @ np.maximum(H_np, 0.0).T
    ym = g64 @ np.maximum(-H_np, 0.0).T
    m64 = 2.0 * (yp - ym) / alpha - (H_np @ np.ones(N))
    ref = (m64 @ H_pinv_np.T).reshape(B, C, h, w)

    err = np.linalg.norm(np.asarray(z, np.float64) - ref) / np.linalg.norm(ref)
    assert z.shape == (B, C, h, w)
    assert err < 5e-2, f"relative error too large: {err}"
    assert np.allclose(np.asarray(z), np.asarray(z2)), "memoized path mismatch"
    # With full Hadamard sampling the network is a near-identity (as in the
    # PinvNet docstring example), so z ~= x.
    rel_id = np.linalg.norm(np.asarray(z) - np.asarray(x)) / np.linalg.norm(np.asarray(x))
    assert rel_id < 5e-2, f"reconstruction error too large: {rel_id}"

    print("KERNEL_OK")
</pallas_src>

<mosaic_0001>
module attributes {stable_mosaic.version = 11 : i64} {
  func.func @_pinvnet_kernel(%arg0: i32, %arg1: i32, %arg2: i32, %arg3: memref<16x256xbf16, #tpu.memory_space<vmem>>, %arg4: memref<256x256xbf16, #tpu.memory_space<vmem>>, %arg5: memref<1x256xf32, #tpu.memory_space<vmem>>, %arg6: memref<16x256xf32, #tpu.memory_space<vmem>>) attributes {dimension_semantics = [#tpu.dimension_semantics<parallel>, #tpu.dimension_semantics<parallel>, #tpu.dimension_semantics<arbitrary>], iteration_bounds = array<i64: 1, 1, 1>, scalar_prefetch = 0 : i64, scratch_operands = 0 : i64, tpu.core_type = #tpu.core_type<tc>, window_params = [{transform_indices = @transform_0, window_bounds = array<i64: 16, 256>}, {transform_indices = @transform_1, window_bounds = array<i64: 256, 256>}, {transform_indices = @transform_2, window_bounds = array<i64: 1, 256>}, {transform_indices = @transform_3, window_bounds = array<i64: 16, 256>}]} {
    %c0_i32 = arith.constant 0 : i32
    %0 = arith.cmpi eq, %arg2, %c0_i32 : i32
    %1 = arith.extui %0 : i1 to i32
    %c0_i32_0 = arith.constant 0 : i32
    %2 = arith.cmpi ne, %1, %c0_i32_0 : i32
    scf.if %2 {
      %cst_10 = arith.constant 0.000000e+00 : f32
      %12 = vector.broadcast %cst_10 : f32 to vector<16x256xf32>
      %c0_11 = arith.constant 0 : index
      %c0_12 = arith.constant 0 : index
      %13 = vector.load %arg6[%c0_11, %c0_12] : memref<16x256xf32, #tpu.memory_space<vmem>>, vector<16x256xf32>
      tpu.vector_store %arg6[%c0_11, %c0_12], %12 {strides = array<i32>} : memref<16x256xf32, #tpu.memory_space<vmem>>, vector<16x256xf32>,
    } else {
    }
    %c0 = arith.constant 0 : index
    %c0_1 = arith.constant 0 : index
    %3 = vector.load %arg6[%c0, %c0_1] : memref<16x256xf32, #tpu.memory_space<vmem>>, vector<16x256xf32>
    %c0_2 = arith.constant 0 : index
    %c0_3 = arith.constant 0 : index
    %4 = vector.load %arg3[%c0_2, %c0_3] : memref<16x256xbf16, #tpu.memory_space<vmem>>, vector<16x256xbf16>
    %c0_4 = arith.constant 0 : index
    %c0_5 = arith.constant 0 : index
    %5 = vector.load %arg4[%c0_4, %c0_5] : memref<256x256xbf16, #tpu.memory_space<vmem>>, vector<256x256xbf16>
    %cst = arith.constant dense<0.000000e+00> : vector<16x256xf32>
    %6 = tpu.matmul %4, %5, %cst {dimension_numbers = #tpu.dot_dimension_numbers<[1], [0], [0], [1], [0, 0, 1, 1], [], []>} : vector<16x256xbf16>, vector<256x256xbf16>, vector<16x256xf32> -> vector<16x256xf32>
    %7 = arith.addf %3, %6 : vector<16x256xf32>
    %c0_6 = arith.constant 0 : index
    %c0_7 = arith.constant 0 : index
    %8 = vector.load %arg6[%c0_6, %c0_7] : memref<16x256xf32, #tpu.memory_space<vmem>>, vector<16x256xf32>
    tpu.vector_store %arg6[%c0_6, %c0_7], %7 {strides = array<i32>} : memref<16x256xf32, #tpu.memory_space<vmem>>, vector<16x256xf32>,
    %c0_i32_8 = arith.constant 0 : i32
    %9 = arith.cmpi eq, %arg2, %c0_i32_8 : i32
    %10 = arith.extui %9 : i1 to i32
    %c0_i32_9 = arith.constant 0 : i32
    %11 = arith.cmpi ne, %10, %c0_i32_9 : i32
    scf.if %11 {
      %c0_10 = arith.constant 0 : index
      %c0_11 = arith.constant 0 : index
      %12 = vector.load %arg6[%c0_10, %c0_11] : memref<16x256xf32, #tpu.memory_space<vmem>>, vector<16x256xf32>
      %c0_12 = arith.constant 0 : index
      %c0_13 = arith.constant 0 : index
      %13 = vector.load %arg5[%c0_12, %c0_13] : memref<1x256xf32, #tpu.memory_space<vmem>>, vector<1x256xf32>
      %14 = vector.broadcast %13 : vector<1x256xf32> to vector<16x256xf32>
      %15 = arith.addf %12, %14 : vector<16x256xf32>
      %c0_14 = arith.constant 0 : index
      %c0_15 = arith.constant 0 : index
      %16 = vector.load %arg6[%c0_14, %c0_15] : memref<16x256xf32, #tpu.memory_space<vmem>>, vector<16x256xf32>
      tpu.vector_store %arg6[%c0_14, %c0_15], %15 {strides = array<i32>} : memref<16x256xf32, #tpu.memory_space<vmem>>, vector<16x256xf32>,
    } else {
    }
    return
  }
  func.func @transform_0(%arg0: i32, %arg1: i32, %arg2: i32) -> (i32, i32) {
    %c0_i32 = arith.constant 0 : i32
    return %arg0, %arg2 : i32, i32
  }
  func.func @transform_1(%arg0: i32, %arg1: i32, %arg2: i32) -> (i32, i32) {
    %c0_i32 = arith.constant 0 : i32
    return %arg2, %arg1 : i32, i32
  }
  func.func @transform_2(%arg0: i32, %arg1: i32, %arg2: i32) -> (i32, i32) {
    %c0_i32 = arith.constant 0 : i32
    %c0_i32_0 = arith.constant 0 : i32
    return %c0_i32, %arg1 : i32, i32
  }
  func.func @transform_3(%arg0: i32, %arg1: i32, %arg2: i32) -> (i32, i32) {
    %c0_i32 = arith.constant 0 : i32
    return %arg0, %arg1 : i32, i32
  }
}

</mosaic_0001>

<llo_original>
// kernel: tpu_custom_call.1
$region0: #{tpu_custom_call.1}
  #allocation0 [shape = 'u32[]', space=smem, size = 0x4, offset = 0x4, fixed_abs, tag = 'smem constant byte address 0x4 - core index']
  #allocation1 [shape = 'u32[144,128]{1,0:T(1,128)}', space=vmem, size = 0x12000, scoped, tag = 'internal scratch']
  %s0 = inlined_call_operand.hbm [shape: bf16[16,256], index: 0, kind: input, shape index: {}]
  %s1 = inlined_call_operand.hbm [shape: bf16[256,256], index: 1, kind: input, shape index: {}]
  %s2 = inlined_call_operand.vmem [shape: f32[1,256], index: 2, kind: input, shape index: {}]
  %s3 = inlined_call_operand.hbm [shape: f32[16,256], index: 3, kind: output, shape index: {}]
  %s4 = sld [smem:[#allocation0]]
  $region38: #{tpu_custom_call.1} parent=0
    _
  %s6 = ssub.s32 1, %s4
  %s7 = scalar_select 0, %s6, %s4
  $region1: #{tpu_custom_call.1} parent=0
    #allocation2 [shape = 'u8[8192]{0}', space=vmem, size = 0x2000, scoped, tag = 'input window, operand 0, single buffered']
    #allocation3 [shape = 's32[1]{0}', space=sflag, size = 0x4, scoped, tag = 'scoped memory for tpu_custom_call.1']
    #allocation4 [shape = 's32[1]{0}', space=sflag, size = 0x4, scoped, tag = 'scoped memory for tpu_custom_call.1']
    #allocation5 [shape = 'u8[131072]{0}', space=vmem, size = 0x20000, scoped, tag = 'input window, operand 1, single buffered']
    #allocation6 [shape = 's32[1]{0}', space=sflag, size = 0x4, scoped, tag = 'scoped memory for tpu_custom_call.1']
    #allocation7 [shape = 'u8[16384]{0}', space=vmem, size = 0x4000, scoped, tag = 'output window, operand 0, single buffered']
    %8 = vsyncpa [#allocation3], 0
    %9 = vsyncpa [#allocation6], 0
    %10 = vsyncpa [#allocation4], 0
    // Predicated region
    $region2: #{tpu_custom_call.1} parent=1 // pred_check
      _
    $region3: #{tpu_custom_call.1} parent=1 // pred_check_branch
      %12 = sbr.rel (0) target = $region5
    $region4: #{tpu_custom_call.1} parent=1 // pred_region
      %s14 = ssub.s32 256, 256
      %15 = vsyncadd [#allocation3], %s14
      %s16 = sshll.u32 [#allocation2], 4
      %s17 = int_to_ptr.vmem [resolvable:$true] %s16
      %22 = dma.hbm_to_vmem [thread:$0]  %s0, 256, %s17, [#allocation3], 128, 128, 8
    $region5: #{tpu_custom_call.1} parent=1 // pred_fallthru
      _
    // Predicated region
    $region6: #{tpu_custom_call.1} parent=1 // pred_check
      _
    $region7: #{tpu_custom_call.1} parent=1 // pred_check_branch
      %24 = sbr.rel (0) target = $region9
    $region8: #{tpu_custom_call.1} parent=1 // pred_region
      %s26 = ssub.s32 4096, 4096
      %27 = vsyncadd [#allocation6], %s26
      %s28 = sshll.u32 [#allocation5], 4
      %s29 = int_to_ptr.vmem [resolvable:$true] %s28
      %34 = dma.hbm_to_vmem [thread:$0]  %s1, 4096, %s29, [#allocation6], 128, 128, 8
    $region9: #{tpu_custom_call.1} parent=1 // pred_fallthru
      _
    // Predicated region
    $region10: #{tpu_custom_call.1} parent=1 // pred_check
      _
    $region11: #{tpu_custom_call.1} parent=1 // pred_check_branch
      %36 = sbr.rel (0) target = $region13
    $region12: #{tpu_custom_call.1} parent=1 // pred_region
      _
    $region13: #{tpu_custom_call.1} parent=1 // pred_fallthru
      _
    // Predicated region
    $region14: #{tpu_custom_call.1} parent=1 // pred_check
      _
    $region15: #{tpu_custom_call.1} parent=1 // pred_check_branch
      %38 = sbr.rel (0) target = $region17
    $region16: #{tpu_custom_call.1} parent=1 // pred_region
      %39 = dma.done [#allocation3], 256
    $region17: #{tpu_custom_call.1} parent=1 // pred_fallthru
      _
    // Predicated region
    $region18: #{tpu_custom_call.1} parent=1 // pred_check
      _
    $region19: #{tpu_custom_call.1} parent=1 // pred_check_branch
      %41 = sbr.rel (0) target = $region21
    $region20: #{tpu_custom_call.1} parent=1 // pred_region
      %42 = dma.done [#allocation6], 4096
    $region21: #{tpu_custom_call.1} parent=1 // pred_fallthru
      _
    %p43 = scmp.eq.s32.totalorder 0, 0
    // Predicated region
    $region22: #{tpu_custom_call.1} parent=1 // pred_check
      %p44 = pneg %p43
    $region23: #{tpu_custom_call.1} parent=1 // pred_check_branch
      %46 = sbr.rel (%p44) target = $region25
    $region24: #{tpu_custom_call.1} parent=1 // pred_region
      %47 = vst [vmem:[#allocation7] sm:$0xff] 0.0
      %48 = vst [vmem:[#allocation7 + $0x8] sm:$0xff] 0.0
      %49 = vst [vmem:[#allocation7 + $0x10] sm:$0xff] 0.0
      %50 = vst [vmem:[#allocation7 + $0x18] sm:$0xff] 0.0
    $region25: #{tpu_custom_call.1} parent=1 // pred_fallthru
      _
    %v51 = vld [vmem:[#allocation7] sm:$0xff]
    %v52 = vld [vmem:[#allocation7 + $0x8] sm:$0xff]
    %v53 = vld [vmem:[#allocation7 + $0x10] sm:$0xff]
    %v54 = vld [vmem:[#allocation7 + $0x18] sm:$0xff]
    %v55 = vld [vmem:[#allocation2] sm:$0xff]
    %v56 = vld [vmem:[#allocation2 + $0x8] sm:$0xff]
    %v57 = vld [vmem:[#allocation5] sm:$0xff]
    %v58 = vld [vmem:[#allocation5 + $0x8] sm:$0xff]
    %v59 = vld [vmem:[#allocation5 + $0x10] sm:$0xff]
    %v60 = vld [vmem:[#allocation5 + $0x18] sm:$0xff]
    %v61 = vld [vmem:[#allocation5 + $0x20] sm:$0xff]
    %v62 = vld [vmem:[#allocation5 + $0x28] sm:$0xff]
    %v63 = vld [vmem:[#allocation5 + $0x30] sm:$0xff]
    %v64 = vld [vmem:[#allocation5 + $0x38] sm:$0xff]
    %v65 = vld [vmem:[#allocation5 + $0x40] sm:$0xff]
    %v66 = vld [vmem:[#allocation5 + $0x48] sm:$0xff]
    %v67 = vld [vmem:[#allocation5 + $0x50] sm:$0xff]
    %v68 = vld [vmem:[#allocation5 + $0x58] sm:$0xff]
    %v69 = vld [vmem:[#allocation5 + $0x60] sm:$0xff]
    %v70 = vld [vmem:[#allocation5 + $0x68] sm:$0xff]
    %v71 = vld [vmem:[#allocation5 + $0x70] sm:$0xff]
    %v72 = vld [vmem:[#allocation5 + $0x78] sm:$0xff]
    %v73 = vld [vmem:[#allocation5 + $0x80] sm:$0xff]
    %v74 = vld [vmem:[#allocation5 + $0x88] sm:$0xff]
    %v75 = vld [vmem:[#allocation5 + $0x90] sm:$0xff]
    %v76 = vld [vmem:[#allocation5 + $0x98] sm:$0xff]
    %v77 = vld [vmem:[#allocation5 + $0xa0] sm:$0xff]
    %v78 = vld [vmem:[#allocation5 + $0xa8] sm:$0xff]
    %v79 = vld [vmem:[#allocation5 + $0xb0] sm:$0xff]
    %v80 = vld [vmem:[#allocation5 + $0xb8] sm:$0xff]
    %v81 = vld [vmem:[#allocation5 + $0xc0] sm:$0xff]
    %v82 = vld [vmem:[#allocation5 + $0xc8] sm:$0xff]
    %v83 = vld [vmem:[#allocation5 + $0xd0] sm:$0xff]
    %v84 = vld [vmem:[#allocation5 + $0xd8] sm:$0xff]
    %v85 = vld [vmem:[#allocation5 + $0xe0] sm:$0xff]
    %v86 = vld [vmem:[#allocation5 + $0xe8] sm:$0xff]
    %v87 = vld [vmem:[#allocation5 + $0xf0] sm:$0xff]
    %v88 = vld [vmem:[#allocation5 + $0xf8] sm:$0xff]
    %v91 = vunpack.c.l.b16 %v55
    %v92 = vunpack.c.h.b16 %v55
    %v93 = vunpack.c.l.b16 %v56
    %v94 = vunpack.c.h.b16 %v56
    %v95 = vpack.c.b16 %v93, %v91
    %v96 = vpack.c.b16 %v94, %v92
    %v131 = vunpack.c.l.b16 %v57
    %v132 = vunpack.c.h.b16 %v57
    %v133 = vunpack.c.l.b16 %v58
    %v134 = vunpack.c.h.b16 %v58
    %v135 = vunpack.c.l.b16 %v59
    %v136 = vunpack.c.h.b16 %v59
    %v137 = vunpack.c.l.b16 %v60
    %v138 = vunpack.c.h.b16 %v60
    %v139 = vunpack.c.l.b16 %v61
    %v140 = vunpack.c.h.b16 %v61
    %v141 = vunpack.c.l.b16 %v62
    %v142 = vunpack.c.h.b16 %v62
    %v143 = vunpack.c.l.b16 %v63
    %v144 = vunpack.c.h.b16 %v63
    %v145 = vunpack.c.l.b16 %v64
    %v146 = vunpack.c.h.b16 %v64
    %v147 = vunpack.c.l.b16 %v65
    %v148 = vunpack.c.h.b16 %v65
    %v149 = vunpack.c.l.b16 %v66
    %v150 = vunpack.c.h.b16 %v66
    %v151 = vunpack.c.l.b16 %v67
    %v152 = vunpack.c.h.b16 %v67
    %v153 = vunpack.c.l.b16 %v68
    %v154 = vunpack.c.h.b16 %v68
    %v155 = vunpack.c.l.b16 %v69
    %v156 = vunpack.c.h.b16 %v69
    %v157 = vunpack.c.l.b16 %v70
    %v158 = vunpack.c.h.b16 %v70
    %v159 = vunpack.c.l.b16 %v71
    %v160 = vunpack.c.h.b16 %v71
    %v161 = vunpack.c.l.b16 %v72
    %v162 = vunpack.c.h.b16 %v72
    %v163 = vunpack.c.l.b16 %v73
    %v164 = vunpack.c.h.b16 %v73
    %v165 = vunpack.c.l.b16 %v74
    %v166 = vunpack.c.h.b16 %v74
    %v167 = vunpack.c.l.b16 %v75
    %v168 = vunpack.c.h.b16 %v75
    %v169 = vunpack.c.l.b16 %v76
    %v170 = vunpack.c.h.b16 %v76
    %v171 = vunpack.c.l.b16 %v77
    %v172 = vunpack.c.h.b16 %v77
    %v173 = vunpack.c.l.b16 %v78
    %v174 = vunpack.c.h.b16 %v78
    %v175 = vunpack.c.l.b16 %v79
    %v176 = vunpack.c.h.b16 %v79
    %v177 = vunpack.c.l.b16 %v80
    %v178 = vunpack.c.h.b16 %v80
    %v179 = vunpack.c.l.b16 %v81
    %v180 = vunpack.c.h.b16 %v81
    %v181 = vunpack.c.l.b16 %v82
    %v182 = vunpack.c.h.b16 %v82
    %v183 = vunpack.c.l.b16 %v83
    %v184 = vunpack.c.h.b16 %v83
    %v185 = vunpack.c.l.b16 %v84
    %v186 = vunpack.c.h.b16 %v84
    %v187 = vunpack.c.l.b16 %v85
    %v188 = vunpack.c.h.b16 %v85
    %v189 = vunpack.c.l.b16 %v86
    %v190 = vunpack.c.h.b16 %v86
    %v191 = vunpack.c.l.b16 %v87
    %v192 = vunpack.c.h.b16 %v87
    %v193 = vunpack.c.l.b16 %v88
    %v194 = vunpack.c.h.b16 %v88
    %v195 = vpack.c.b16 %v133, %v131
    %v196 = vpack.c.b16 %v134, %v132
    %v197 = vpack.c.b16 %v137, %v135
    %v198 = vpack.c.b16 %v138, %v136
    %v199 = vpack.c.b16 %v141, %v139
    %v200 = vpack.c.b16 %v142, %v140
    %v201 = vpack.c.b16 %v145, %v143
    %v202 = vpack.c.b16 %v146, %v144
    %v203 = vpack.c.b16 %v149, %v147
    %v204 = vpack.c.b16 %v150, %v148
    %v205 = vpack.c.b16 %v153, %v151
    %v206 = vpack.c.b16 %v154, %v152
    %v207 = vpack.c.b16 %v157, %v155
    %v208 = vpack.c.b16 %v158, %v156
    %v209 = vpack.c.b16 %v161, %v159
    %v210 = vpack.c.b16 %v162, %v160
    %v211 = vpack.c.b16 %v165, %v163
    %v212 = vpack.c.b16 %v166, %v164
    %v213 = vpack.c.b16 %v169, %v167
    %v214 = vpack.c.b16 %v170, %v168
    %v215 = vpack.c.b16 %v173, %v171
    %v216 = vpack.c.b16 %v174, %v172
    %v217 = vpack.c.b16 %v177, %v175
    %v218 = vpack.c.b16 %v178, %v176
    %v219 = vpack.c.b16 %v181, %v179
    %v220 = vpack.c.b16 %v182, %v180
    %v221 = vpack.c.b16 %v185, %v183
    %v222 = vpack.c.b16 %v186, %v184
    %v223 = vpack.c.b16 %v189, %v187
    %v224 = vpack.c.b16 %v190, %v188
    %v225 = vpack.c.b16 %v193, %v191
    %v226 = vpack.c.b16 %v194, %v192
    %259 = vmatprep.subr.bf16.mxu0 %v210
    %260 = vmatpush1.bf16.msra.mxu0 %v209
    %261 = vmatprep.subr.bf16.mxu0 %v208
    %262 = vmatpush1.bf16.msra.mxu0 %v207
    %263 = vmatprep.subr.bf16.mxu0 %v206
    %264 = vmatpush1.bf16.msra.mxu0 %v205
    %265 = vmatprep.subr.bf16.mxu0 %v204
    %266 = vmatpush1.bf16.msra.mxu0 %v203
    %267 = vmatprep.subr.bf16.mxu0 %v202
    %268 = vmatpush1.bf16.msra.mxu0 %v201
    %269 = vmatprep.subr.bf16.mxu0 %v200
    %270 = vmatpush1.bf16.msra.mxu0 %v199
    %271 = vmatprep.subr.bf16.mxu0 %v198
    %272 = vmatpush1.bf16.msra.mxu0 %v197
    %273 = vmatprep.subr.bf16.mxu0 %v196
    %274 = vmatpush1.bf16.msra.mxu0 %v195
    %275 = vmatprep.subr.bf16.mxu0 %v226
    %276 = vmatpush2.bf16.msra.mxu0 %v225
    %277 = vmatprep.subr.bf16.mxu0 %v224
    %278 = vmatpush2.bf16.msra.mxu0 %v223
    %279 = vmatprep.subr.bf16.mxu0 %v222
    %280 = vmatpush2.bf16.msra.mxu0 %v221
    %281 = vmatprep.subr.bf16.mxu0 %v220
    %282 = vmatpush2.bf16.msra.mxu0 %v219
    %283 = vmatprep.subr.bf16.mxu0 %v218
    %284 = vmatpush2.bf16.msra.mxu0 %v217
    %285 = vmatprep.subr.bf16.mxu0 %v216
    %286 = vmatpush2.bf16.msra.mxu0 %v215
    %287 = vmatprep.subr.bf16.mxu0 %v214
    %288 = vmatpush2.bf16.msra.mxu0 %v213
    %289 = vmatprep.subr.bf16.mxu0 %v212
    %290 = vmatpush2.bf16.msra.mxu0 %v211
    %291 = vmatprep.mubr.bf16.mxu0 %v96
    %292 = vmatmul.mubr.bf16.gmra.mxu0 %v95
    %v293 = vpop.f32.mrf.mxu0
    %v294 = vadd.f32 0.0, %v293
    %v295 = vpop.f32.mrf.mxu0
    %v296 = vadd.f32 0.0, %v295
    %v297 = vpop.f32.mrf.mxu0
    %v298 = vadd.f32 0.0, %v297
    %v299 = vpop.f32.mrf.mxu0
    %v300 = vadd.f32 0.0, %v299
    %301 = vdwg.mxu0
    %v302 = vadd.f32 %v51, %v294
    %v303 = vadd.f32 %v52, %v296
    %v304 = vadd.f32 %v53, %v298
    %v305 = vadd.f32 %v54, %v300
    %306 = vst [vmem:[#allocation7] sm:$0xff] %v302
    %307 = vst [vmem:[#allocation7 + $0x8] sm:$0xff] %v303
    %308 = vst [vmem:[#allocation7 + $0x10] sm:$0xff] %v304
    %309 = vst [vmem:[#allocation7 + $0x18] sm:$0xff] %v305
    // Predicated region
    $region26: #{tpu_custom_call.1} parent=1 // pred_check
      %p310 = pneg %p43
    $region27: #{tpu_custom_call.1} parent=1 // pred_check_branch
      %312 = sbr.rel (%p310) target = $region29
    $region28: #{tpu_custom_call.1} parent=1 // pred_region
      %v313 = vld [vmem:[#allocation7] sm:$0xff]
      %v314 = vld [vmem:[#allocation7 + $0x8] sm:$0xff]
      %v315 = vld [vmem:[#allocation7 + $0x10] sm:$0xff]
      %v316 = vld [vmem:[#allocation7 + $0x18] sm:$0xff]
      %v317 = vld [vmem:[%s2] sm:$0x3]
      %v319 = vlaneseq
      %v320 = vshrl.u32 %v319, 7
      %v321 = vsub.s32 0, %v320
      %v322 = vrot.slane %v317, %v321
      %v323 = vlaneseq
      %v324 = vshrl.u32 %v323, 7
      %v325 = vsub.s32 1, %v324
      %v326 = vrot.slane %v317, %v325
      %v329 = vadd.f32 %v313, %v322
      %v330 = vadd.f32 %v314, %v326
      %v331 = vadd.f32 %v315, %v322
      %v332 = vadd.f32 %v316, %v326
      %333 = vst [vmem:[#allocation7] sm:$0xff] %v329
      %334 = vst [vmem:[#allocation7 + $0x8] sm:$0xff] %v330
      %335 = vst [vmem:[#allocation7 + $0x10] sm:$0xff] %v331
      %336 = vst [vmem:[#allocation7 + $0x18] sm:$0xff] %v332
    $region29: #{tpu_custom_call.1} parent=1 // pred_fallthru
      _
    // Predicated region
    $region30: #{tpu_custom_call.1} parent=1 // pred_check
      _
    $region31: #{tpu_custom_call.1} parent=1 // pred_check_branch
      %338 = sbr.rel (0) target = $region33
    $region32: #{tpu_custom_call.1} parent=1 // pred_region
      %s340 = ssub.s32 512, 512
      %341 = vsyncadd [#allocation4], %s340
      %s342 = sshll.u32 [#allocation7], 4
      %s343 = int_to_ptr.vmem [resolvable:$true] %s342
      %348 = dma.vmem_to_hbm [thread:$0]  %s343, 512, %s3, [#allocation4], 256, 256, 16
    $region33: #{tpu_custom_call.1} parent=1 // pred_fallthru
      _
    // Predicated region
    $region34: #{tpu_custom_call.1} parent=1 // pred_check
      _
    $region35: #{tpu_custom_call.1} parent=1 // pred_check_branch
      %350 = sbr.rel (0) target = $region37
    $region36: #{tpu_custom_call.1} parent=1 // pred_region
      %351 = dma.done [#allocation4], 512
    $region37: #{tpu_custom_call.1} parent=1 // pred_fallthru
      _
    %352 = vsyncpa [#allocation3], 1
    %353 = vsyncpa [#allocation6], 1
    %354 = vsyncpa [#allocation4], 1

</llo_original>
